<compile_context>
chip_gen: v6e
topology: v6e:2x2x1
jax: 0.10.0
libtpu: 0.0.40
codegen_flags: <defaults>
</compile_context>

<pallas_src>
import numpy as np
import jax
import jax.numpy as jnp
from jax.experimental import pallas as pl
from jax.experimental.pallas import tpu as pltpu

# ---------------- demo configuration (small shapes, consistent with module) ---
N_TOKENS = 10          # vocabulary size (n_tokens <= d_model asserted in module)
D_MODEL = 128          # d_model; 128 -> lane-dense, full-vreg output rows
BATCH = 2
SEQ = 16

_LANES = 128
_SUBLANES = 8
_VMEM_TILE_BUDGET = 24 << 20   # conservative: fits v7x's 32 MiB scoped VMEM default
_TWO_TC_MIN_ROWS = 2048        # split rows across >=2 grid steps above this (v7x megacore)


def _round_up(a, b):
    return -(-a // b) * b


def _one_hot_kernel(ids_ref, o_ref):
    """ids_ref: (TM, 1) int32 token ids.   o_ref: (TM, D) float32 one-hot rows."""
    ids = ids_ref[...]                                              # (TM, 1)
    classes = jax.lax.broadcasted_iota(jnp.int32, o_ref.shape, 1)   # (TM, D)
    # Lane-broadcast compare + select on the VPU.  Out-of-range / negative ids
    # produce all-zero rows (matches jax.nn.one_hot; torch F.one_hot would raise).
    o_ref[...] = (ids == classes).astype(o_ref.dtype)


def _choose_row_tile(n, d_model, row_tile):
    """Pick rows per grid step: big (amortize step cost), VMEM-budgeted (v7x-safe),
    and >= 2 steps for mid-size inputs so both v7x TensorCores get work."""
    out_row_bytes = _round_up(max(d_model, 1), _LANES) * 4   # lane-padded f32 output row
    ids_row_bytes = _LANES * 4                               # (tm,1) i32 lane-pads to 128
    per_row = 2 * (out_row_bytes + ids_row_bytes)            # double-buffered in + out
    cap = max(_SUBLANES, (_VMEM_TILE_BUDGET // per_row) // _SUBLANES * _SUBLANES)
    tile = max(_SUBLANES, (min(int(row_tile), cap) // _SUBLANES) * _SUBLANES)
    if n <= tile:
        if n >= _TWO_TC_MIN_ROWS:
            # >= 2 grid steps so dimension_semantics=("parallel",) can shard rows
            # across v7x's two TensorCores.  No effect on v5e/v6e (1 TC).
            return min(tile, _round_up(pl.cdiv(n, 2), _SUBLANES))
        return n            # single block; block dim == full extent is always legal
    return tile


def one_hot_encode(x, d_model=D_MODEL, row_tile=8192, min_pallas_bytes=1 << 20):
    """Pallas equivalent of OneHotEncoder.forward: one_hot(x.squeeze(-1), d_model).float().

    x: integer tensor, typically (..., 1).  Returns (..., d_model) float32.
    Outputs smaller than `min_pallas_bytes` fall back to jax.nn.one_hot (the
    custom-call launch overhead dominates there); pass 0 to force the kernel.
    """
    if x.ndim >= 1 and x.shape[-1] == 1:
        x = x[..., 0]                       # torch's x.squeeze(-1)
    lead = x.shape
    n = int(np.prod(lead)) if lead else 1

    if n == 0:
        return jnp.zeros((*lead, d_model), jnp.float32)

    if min_pallas_bytes and n * d_model * 4 < min_pallas_bytes:
        # Small-input fallback: XLA's fused one_hot is strictly faster at this scale.
        return jax.nn.one_hot(x, d_model, dtype=jnp.float32)

    ids = x.reshape(n, 1).astype(jnp.int32)   # contiguous reshape: free

    tm = _choose_row_tile(n, d_model, row_tile)
    grid = pl.cdiv(n, tm)

    # Actual double-buffered VMEM footprint of the chosen tile (+ scratch slack).
    tm_pad = _round_up(tm, _SUBLANES)
    vmem_bytes = 2 * tm_pad * (_LANES * 4 + _round_up(d_model, _LANES) * 4) + (4 << 20)

    out = pl.pallas_call(
        _one_hot_kernel,
        out_shape=jax.ShapeDtypeStruct((n, d_model), jnp.float32),
        grid_spec=pltpu.PrefetchScalarGridSpec(
            num_scalar_prefetch=0,
            grid=(grid,),
            in_specs=[pl.BlockSpec((tm, 1), lambda i: (i, 0))],
            out_specs=pl.BlockSpec((tm, d_model), lambda i: (i, 0)),
        ),
        compiler_params=pltpu.CompilerParams(
            dimension_semantics=("parallel",),
            vmem_limit_bytes=int(vmem_bytes),
        ),
        cost_estimate=pl.CostEstimate(
            flops=0, transcendentals=0,
            bytes_accessed=n * d_model * 4 + n * 4),
    )(ids)

    return out.reshape(*lead, d_model)


def _reference_forward(x, d_model=D_MODEL):
    """Plain-JAX reference matching the PyTorch module (modulo F.one_hot's range check)."""
    if x.ndim >= 1 and x.shape[-1] == 1:
        x = x[..., 0]
    return jax.nn.one_hot(x, d_model, dtype=jnp.float32)


if __name__ == "__main__":
    key = jax.random.PRNGKey(0)

    # 1) Module-sized demo: (batch=2, seq=16, 1) ids -> (2, 16, 128) one-hot rows.
    x = jax.random.randint(key, (BATCH, SEQ, 1), 0, N_TOKENS, dtype=jnp.int32)
    y = jax.block_until_ready(one_hot_encode(x, D_MODEL, min_pallas_bytes=0))
    y_ref = jax.block_until_ready(_reference_forward(x, D_MODEL))
    assert y.shape == (BATCH, SEQ, D_MODEL)
    np.testing.assert_array_equal(np.asarray(y), np.asarray(y_ref))

    # 2) Ragged multi-block path: 300 rows with a 128-row tile -> grid=3; the final
    #    partial block's writeback is clipped by Pallas (no post-hoc tail slice copy).
    x2 = jax.random.randint(jax.random.fold_in(key, 1), (3, 100, 1), 0, N_TOKENS,
                            dtype=jnp.int32)
    y2 = jax.block_until_ready(one_hot_encode(x2, D_MODEL, row_tile=128,
                                              min_pallas_bytes=0))
    np.testing.assert_array_equal(np.asarray(y2),
                                  np.asarray(_reference_forward(x2, D_MODEL)))

    # 3) Mid-size path: 2048 rows split into 2 "parallel" grid steps (v7x 2-TC sharding).
    x3 = jax.random.randint(jax.random.fold_in(key, 2), (2, 1024, 1), 0, N_TOKENS,
                            dtype=jnp.int32)
    y3 = jax.block_until_ready(one_hot_encode(x3, D_MODEL, min_pallas_bytes=0))
    np.testing.assert_array_equal(np.asarray(y3),
                                  np.asarray(_reference_forward(x3, D_MODEL)))

    print("KERNEL_OK")
</pallas_src>

<mosaic_0001>
module attributes {stable_mosaic.version = 11 : i64} {
  func.func @_one_hot_kernel(%arg0: i32, %arg1: memref<32x1xi32, #tpu.memory_space<vmem>>, %arg2: memref<32x128xf32, #tpu.memory_space<vmem>>) attributes {dimension_semantics = [#tpu.dimension_semantics<parallel>], iteration_bounds = array<i64: 1>, scalar_prefetch = 0 : i64, scratch_operands = 0 : i64, tpu.core_type = #tpu.core_type<tc>, window_params = [{transform_indices = @transform_0, window_bounds = array<i64: 32, 1>}, {transform_indices = @transform_1, window_bounds = array<i64: 32, 128>}]} {
    %c0 = arith.constant 0 : index
    %c0_0 = arith.constant 0 : index
    %0 = vector.load %arg1[%c0, %c0_0] : memref<32x1xi32, #tpu.memory_space<vmem>>, vector<32x1xi32>
    %1 = tpu.iota {dimensions = array<i32: 1>} : vector<32x128xi32>
    %2 = vector.broadcast %0 : vector<32x1xi32> to vector<32x128xi32>
    %3 = arith.cmpi eq, %2, %1 : vector<32x128xi32>
    %4 = arith.extui %3 : vector<32x128xi1> to vector<32x128xi32>
    %5 = arith.sitofp %4 : vector<32x128xi32> to vector<32x128xf32>
    %c0_1 = arith.constant 0 : index
    %c0_2 = arith.constant 0 : index
    %6 = vector.load %arg2[%c0_1, %c0_2] : memref<32x128xf32, #tpu.memory_space<vmem>>, vector<32x128xf32>
    tpu.vector_store %arg2[%c0_1, %c0_2], %5 {strides = array<i32>} : memref<32x128xf32, #tpu.memory_space<vmem>>, vector<32x128xf32>,
    return
  }
  func.func @transform_0(%arg0: i32) -> (i32, i32) {
    %c0_i32 = arith.constant 0 : i32
    %c0_i32_0 = arith.constant 0 : i32
    return %arg0, %c0_i32 : i32, i32
  }
  func.func @transform_1(%arg0: i32) -> (i32, i32) {
    %c0_i32 = arith.constant 0 : i32
    %c0_i32_0 = arith.constant 0 : i32
    return %arg0, %c0_i32 : i32, i32
  }
}

</mosaic_0001>

<llo_original>
// kernel: tpu_custom_call.1
$region0: #{tpu_custom_call.1}
  #allocation0 [shape = 'u32[]', space=smem, size = 0x4, offset = 0x4, fixed_abs, tag = 'smem constant byte address 0x4 - core index']
  #allocation1 [shape = 'u32[144,128]{1,0:T(1,128)}', space=vmem, size = 0x12000, scoped, tag = 'internal scratch']
  %s0 = inlined_call_operand.vmem [shape: s32[32,1], index: 0, kind: input, shape index: {}]
  %s1 = inlined_call_operand.hbm [shape: f32[32,128], index: 1, kind: output, shape index: {}]
  %s2 = sld [smem:[#allocation0]]
  $region14: #{tpu_custom_call.1} parent=0
    _
  %s4 = ssub.s32 1, %s2
  %s5 = scalar_select 0, %s4, %s2
  $region1: #{tpu_custom_call.1} parent=0
    #allocation2 [shape = 'u8[16384]{0}', space=vmem, size = 0x4000, scoped, tag = 'output window, operand 0, single buffered']
    #allocation3 [shape = 's32[1]{0}', space=sflag, size = 0x4, scoped, tag = 'scoped memory for tpu_custom_call.1']
    %6 = vsyncpa [#allocation3], 0
    // Predicated region
    $region2: #{tpu_custom_call.1} parent=1 // pred_check
      _
    $region3: #{tpu_custom_call.1} parent=1 // pred_check_branch
      %8 = sbr.rel (0) target = $region5
    $region4: #{tpu_custom_call.1} parent=1 // pred_region
      _
    $region5: #{tpu_custom_call.1} parent=1 // pred_fallthru
      _
    %v9 = vld [vmem:[%s0] sm:$0xff]
    %v10 = vld [vmem:[%s0 + $0x8] sm:$0xff]
    %v11 = vld [vmem:[%s0 + $0x10] sm:$0xff]
    %v12 = vld [vmem:[%s0 + $0x18] sm:$0xff]
    %v13 = vlaneseq
    %v14 = vand.u32 %v13, 127
    %15 = vset.pattern.permute.xlu0 0
    %16 = vperm.xlu0 %15, %v9
    %v17 = vpop.permute.xlu0 %16
    %18 = vset.pattern.permute.xlu0 0
    %19 = vperm.xlu0 %18, %v10
    %v20 = vpop.permute.xlu0 %19
    %21 = vset.pattern.permute.xlu0 0
    %22 = vperm.xlu0 %21, %v11
    %v23 = vpop.permute.xlu0 %22
    %24 = vset.pattern.permute.xlu0 0
    %25 = vperm.xlu0 %24, %v12
    %v26 = vpop.permute.xlu0 %25
    %vm27 = vcmp.eq.s32.totalorder %v17, %v14
    %vm28 = vcmp.eq.s32.totalorder %v20, %v14
    %vm29 = vcmp.eq.s32.totalorder %v23, %v14
    %vm30 = vcmp.eq.s32.totalorder %v26, %v14
    %v31 = vsel %vm27, 1, 0
    %v32 = vsel %vm28, 1, 0
    %v33 = vsel %vm29, 1, 0
    %v34 = vsel %vm30, 1, 0
    %v35 = vcvt.s32.f32 %v31
    %v36 = vcvt.s32.f32 %v32
    %v37 = vcvt.s32.f32 %v33
    %v38 = vcvt.s32.f32 %v34
    %39 = vst [vmem:[#allocation2] sm:$0xff] %v35
    %40 = vst [vmem:[#allocation2 + $0x8] sm:$0xff] %v36
    %41 = vst [vmem:[#allocation2 + $0x10] sm:$0xff] %v37
    %42 = vst [vmem:[#allocation2 + $0x18] sm:$0xff] %v38
    // Predicated region
    $region6: #{tpu_custom_call.1} parent=1 // pred_check
      _
    $region7: #{tpu_custom_call.1} parent=1 // pred_check_branch
      %44 = sbr.rel (0) target = $region9
    $region8: #{tpu_custom_call.1} parent=1 // pred_region
      %s46 = ssub.s32 512, 512
      %47 = vsyncadd [#allocation3], %s46
      %s48 = sshll.u32 [#allocation2], 4
      %s49 = int_to_ptr.vmem [resolvable:$true] %s48
      %54 = dma.vmem_to_hbm [thread:$0]  %s49, 512, %s1, [#allocation3], 128, 128, 8
    $region9: #{tpu_custom_call.1} parent=1 // pred_fallthru
      _
    // Predicated region
    $region10: #{tpu_custom_call.1} parent=1 // pred_check
      _
    $region11: #{tpu_custom_call.1} parent=1 // pred_check_branch
      %56 = sbr.rel (0) target = $region13
    $region12: #{tpu_custom_call.1} parent=1 // pred_region
      %57 = dma.done [#allocation3], 512
    $region13: #{tpu_custom_call.1} parent=1 // pred_fallthru
      _
    %58 = vsyncpa [#allocation3], 1

</llo_original>
